<compile_context>
chip_gen: v7x
topology: tpu7x:2x2x1
jax: 0.10.0
libtpu: 0.0.40
codegen_flags: <defaults>
</compile_context>

<pallas_src>
import functools

import jax
import jax.numpy as jnp
from jax.experimental import pallas as pl
from jax.experimental.pallas import tpu as pltpu

QUANT_MIN = -128
QUANT_MAX = 127
AVERAGING_CONSTANT = 0.1
EPS = float(jnp.finfo(jnp.float32).eps)

_LANE = 128
_ROW_TILE = 2048          # rows per streamed block (1 MiB of f32 per block)


# ---------------------------------------------------------------------------
# Per-generation VMEM budget (v5e/v6e: 128 MiB physical, v7x: 64 MiB)
# ---------------------------------------------------------------------------
def _vmem_budget_bytes():
    try:
        cap = int(pltpu.get_tpu_info().vmem_capacity_bytes)
    except Exception:
        cap = 64 * 1024 * 1024            # conservative (v7x-sized) fallback
    return min((cap * 3) // 4, 100 * 1024 * 1024)


def _fold_to_sublanes(x, reducer):
    """Reduce an (rows, 128) f32 tile to an (8, 128) partial (VPU-only when rows%8==0)."""
    rows = x.shape[0]
    if rows % 8 == 0:
        return reducer(x.reshape(rows // 8, 8, _LANE), axis=0)
    return jnp.broadcast_to(reducer(x, axis=0, keepdims=True), (8, _LANE))


def _calc_qparams(min_val, max_val, quant_min, quant_max):
    min_neg = jnp.minimum(min_val, 0.0)
    max_pos = jnp.maximum(max_val, 0.0)
    scale = jnp.maximum((max_pos - min_neg) / float(quant_max - quant_min), EPS)
    zero_point = jnp.clip(quant_min - jnp.round(min_neg / scale),
                          quant_min, quant_max)
    return scale, zero_point.astype(jnp.int32)


# ---------------------------------------------------------------------------
# Folded kernel: observer (min/max + moving average) + qparams + fake-quantize
# in a single pipelined pallas_call.  grid = (phase, block):
#   phase 0: accumulate min/max partials (+ optionally stash x into a VMEM slab)
#            and compute qparams on the last block (into the resident SMEM out).
#   phase 1: stream the fake-quantized output (from the slab, or by re-reading x).
# ---------------------------------------------------------------------------
def _obs_fq_kernel(state_ref, x_ref, o_ref, stats_ref, mn_ref, mx_ref,
                   *maybe_slab, rows_total, block_rows, quant_min, quant_max,
                   use_slab):
    slab_ref = maybe_slab[0] if use_slab else None
    nblk = -(-rows_total // block_rows)       # static
    phase = pl.program_id(0)
    i = pl.program_id(1)

    @pl.when(phase == 0)
    def _observe():
        x_raw = x_ref[...]
        x = x_raw.astype(jnp.float32)
        if use_slab:
            off = pl.multiple_of(i * block_rows, block_rows)
            slab_ref[pl.ds(off, block_rows), :] = x_raw

        @pl.when(i == 0)
        def _init():
            mn_ref[...] = jnp.full((8, _LANE), jnp.inf, jnp.float32)
            mx_ref[...] = jnp.full((8, _LANE), -jnp.inf, jnp.float32)

        def _acc(x_for_min, x_for_max):
            mn_ref[...] = jnp.minimum(mn_ref[...], _fold_to_sublanes(x_for_min, jnp.min))
            mx_ref[...] = jnp.maximum(mx_ref[...], _fold_to_sublanes(x_for_max, jnp.max))

        if rows_total % block_rows != 0:
            # tail-row masking only on the final block; all other blocks pay
            # nothing beyond the min/max itself.
            @pl.when(i < nblk - 1)
            def _full_blocks():
                _acc(x, x)

            @pl.when(i == nblk - 1)
            def _tail_block():
                rows_valid = rows_total - (nblk - 1) * block_rows   # static
                valid = jax.lax.broadcasted_iota(jnp.int32, x.shape, 0) < rows_valid
                _acc(jnp.where(valid, x, jnp.inf), jnp.where(valid, x, -jnp.inf))
        else:
            _acc(x, x)

        @pl.when(i == nblk - 1)
        def _finalize():
            cur_min = jnp.min(mn_ref[...])
            cur_max = jnp.max(mx_ref[...])
            base_min = state_ref[0]
            base_max = state_ref[1]
            coef = state_ref[2]
            new_min = base_min + coef * (cur_min - base_min)
            new_max = base_max + coef * (cur_max - base_max)
            stats_ref[0] = new_min
            stats_ref[1] = new_max
            # qparams on a (1,128) lane row so true divide / round stay on VPU
            min_neg = jnp.minimum(new_min, 0.0)
            max_pos = jnp.maximum(new_max, 0.0)
            ones = jnp.ones((1, _LANE), jnp.float32)
            scale_row = jnp.maximum(
                (max_pos - min_neg) * ones / float(quant_max - quant_min), EPS)
            zp_row = jnp.clip(float(quant_min) - jnp.round(min_neg / scale_row),
                              float(quant_min), float(quant_max))
            inv_row = ones / scale_row
            stats_ref[2] = jnp.min(scale_row)   # all lanes equal
            stats_ref[3] = jnp.min(zp_row)
            stats_ref[4] = jnp.min(inv_row)

    @pl.when(phase == 1)
    def _fakequant():
        scale = stats_ref[2]
        zp = stats_ref[3]
        inv = stats_ref[4]
        if use_slab:
            off = pl.multiple_of(i * block_rows, block_rows)
            xb = slab_ref[pl.ds(off, block_rows), :].astype(jnp.float32)
        else:
            xb = x_ref[...].astype(jnp.float32)
        xq = jnp.clip(jnp.round(xb * inv + zp),
                      float(quant_min), float(quant_max))
        o_ref[...] = ((xq - zp) * scale).astype(o_ref.dtype)


def pallas_observe_fakequant(x2d, state, *, block_rows, slab_rows_cap, vmem_limit,
                             quant_min=QUANT_MIN, quant_max=QUANT_MAX):
    R, C = x2d.shape
    assert C == _LANE
    bt = R if R <= block_rows else block_rows
    nblk = pl.cdiv(R, bt)
    # With nblk == 1 the single x block stays resident across both phases, so a
    # slab is only useful (and only used) when the tensor spans several blocks.
    use_slab = (nblk > 1) and (R <= slab_rows_cap)

    kern = functools.partial(
        _obs_fq_kernel, rows_total=R, block_rows=bt,
        quant_min=quant_min, quant_max=quant_max, use_slab=use_slab)

    if use_slab:
        # phase 0 streams block i; phase 1 keeps the last block's buffer (no re-read)
        x_map = lambda p, i: (i * (1 - p) + (nblk - 1) * p, 0)
    else:
        # phase 1 re-reads block i from HBM
        x_map = lambda p, i: (i, 0)
    # output block index stays at 0 during phase 0 -> nothing is written back
    # until phase 1 produces real data.
    out_map = lambda p, i: (i * p, 0)

    scratch = [pltpu.VMEM((8, _LANE), jnp.float32),
               pltpu.VMEM((8, _LANE), jnp.float32)]
    if use_slab:
        scratch.append(pltpu.VMEM((nblk * bt, _LANE), x2d.dtype))

    y2d, stats = pl.pallas_call(
        kern,
        out_shape=(jax.ShapeDtypeStruct((R, C), x2d.dtype),
                   jax.ShapeDtypeStruct((5,), jnp.float32)),
        grid=(2, nblk),
        in_specs=[pl.BlockSpec(memory_space=pltpu.SMEM),
                  pl.BlockSpec((bt, C), x_map)],
        out_specs=(pl.BlockSpec((bt, C), out_map),
                   pl.BlockSpec(memory_space=pltpu.SMEM)),
        scratch_shapes=scratch,
        compiler_params=pltpu.CompilerParams(
            dimension_semantics=("arbitrary", "arbitrary"),
            vmem_limit_bytes=int(vmem_limit)),
    )(state, x2d)
    return y2d, stats


# ---------------------------------------------------------------------------
# Observer-only path: per-block (8,128) partial min/max (parallel grid)
# ---------------------------------------------------------------------------
def _minmax_partial_kernel(x_ref, pmin_ref, pmax_ref, *, rows_total, block_rows):
    nblk = -(-rows_total // block_rows)
    i = pl.program_id(0)
    x = x_ref[...].astype(jnp.float32)
    if rows_total % block_rows != 0:
        @pl.when(i < nblk - 1)
        def _full():
            pmin_ref[...] = _fold_to_sublanes(x, jnp.min)
            pmax_ref[...] = _fold_to_sublanes(x, jnp.max)

        @pl.when(i == nblk - 1)
        def _tail():
            rows_valid = rows_total - (nblk - 1) * block_rows
            valid = jax.lax.broadcasted_iota(jnp.int32, x.shape, 0) < rows_valid
            pmin_ref[...] = _fold_to_sublanes(jnp.where(valid, x, jnp.inf), jnp.min)
            pmax_ref[...] = _fold_to_sublanes(jnp.where(valid, x, -jnp.inf), jnp.max)
    else:
        pmin_ref[...] = _fold_to_sublanes(x, jnp.min)
        pmax_ref[...] = _fold_to_sublanes(x, jnp.max)


def pallas_minmax(x2d, row_tile=_ROW_TILE):
    R, C = x2d.shape
    assert C == _LANE and row_tile % 8 == 0
    bt = R if R <= row_tile else row_tile
    nblk = pl.cdiv(R, bt)
    kern = functools.partial(_minmax_partial_kernel, rows_total=R, block_rows=bt)
    pmin, pmax = pl.pallas_call(
        kern,
        out_shape=(jax.ShapeDtypeStruct((nblk * 8, _LANE), jnp.float32),
                   jax.ShapeDtypeStruct((nblk * 8, _LANE), jnp.float32)),
        grid=(nblk,),
        in_specs=[pl.BlockSpec((bt, C), lambda i: (i, 0))],
        out_specs=(pl.BlockSpec((8, _LANE), lambda i: (i, 0)),
                   pl.BlockSpec((8, _LANE), lambda i: (i, 0))),
        compiler_params=pltpu.CompilerParams(
            dimension_semantics=("parallel",)),
    )(x2d)
    return jnp.min(pmin), jnp.max(pmax)


# ---------------------------------------------------------------------------
# Fake-quant-only path: elementwise fake-quantize (per-tensor affine)
# ---------------------------------------------------------------------------
def _fakequant_kernel(q_ref, x_ref, o_ref, *, quant_min, quant_max):
    scale = q_ref[0]
    zp = q_ref[1]
    inv_scale = q_ref[2]
    x = x_ref[...].astype(jnp.float32)
    xq = jnp.clip(jnp.round(x * inv_scale + zp),
                  float(quant_min), float(quant_max))
    o_ref[...] = ((xq - zp) * scale).astype(o_ref.dtype)


def pallas_fake_quantize(x2d, scale, zero_point, row_tile=_ROW_TILE,
                         quant_min=QUANT_MIN, quant_max=QUANT_MAX):
    R, C = x2d.shape
    assert C == _LANE and row_tile % 8 == 0
    bt = R if R <= row_tile else row_tile
    nblk = pl.cdiv(R, bt)
    scale_f = jnp.asarray(scale, jnp.float32).reshape(())
    zp_f = jnp.asarray(zero_point, jnp.float32).reshape(())
    qvec = jnp.stack([scale_f, zp_f, 1.0 / scale_f])
    kern = functools.partial(_fakequant_kernel,
                             quant_min=quant_min, quant_max=quant_max)
    return pl.pallas_call(
        kern,
        out_shape=jax.ShapeDtypeStruct((R, C), x2d.dtype),
        grid=(nblk,),
        in_specs=[pl.BlockSpec(memory_space=pltpu.SMEM),
                  pl.BlockSpec((bt, C), lambda i: (i, 0))],
        out_specs=pl.BlockSpec((bt, C), lambda i: (i, 0)),
        compiler_params=pltpu.CompilerParams(
            dimension_semantics=("parallel",)),
    )(qvec, x2d)


# ---------------------------------------------------------------------------
# Jitted functional forward (pad/reshape + pallas calls + state update)
# ---------------------------------------------------------------------------
@functools.partial(
    jax.jit,
    static_argnames=("observer_on", "fakequant_on", "quant_min", "quant_max",
                     "avg_const", "block_rows", "slab_rows_cap", "vmem_limit"))
def _lpt_forward(x, min_val, max_val, scale, zero_point, *,
                 observer_on, fakequant_on, quant_min, quant_max, avg_const,
                 block_rows, slab_rows_cap, vmem_limit):
    orig_shape = x.shape
    total = x.size
    x_flat = x.reshape(-1)
    pad = (-total) % _LANE
    if pad:
        # TODO(synk): handle ragged lane tails with an in-kernel mask instead of
        # this edge pad (costs one extra copy when total % 128 != 0).
        x_flat = jnp.pad(x_flat, (0, pad), mode="edge")
    x2d = x_flat.reshape(-1, _LANE)

    def _unflatten(y2d):
        y_flat = y2d.reshape(-1)
        if pad:
            y_flat = y_flat[:total]
        return y_flat.reshape(orig_shape)

    first = jnp.logical_and(min_val == jnp.inf, max_val == -jnp.inf)

    if observer_on and fakequant_on:
        state = jnp.stack([jnp.where(first, 0.0, min_val),
                           jnp.where(first, 0.0, max_val),
                           jnp.where(first, 1.0, jnp.float32(avg_const))])
        y2d, stats = pallas_observe_fakequant(
            x2d, state, block_rows=block_rows, slab_rows_cap=slab_rows_cap,
            vmem_limit=vmem_limit, quant_min=quant_min, quant_max=quant_max)
        new_min, new_max = stats[0], stats[1]
        new_scale = stats[2].reshape(1)
        new_zp = stats[3].astype(jnp.int32).reshape(1)
        return _unflatten(y2d), new_min, new_max, new_scale, new_zp

    if observer_on:
        cur_min, cur_max = pallas_minmax(x2d, row_tile=block_rows)
        new_min = jnp.where(first, cur_min,
                            min_val + avg_const * (cur_min - min_val))
        new_max = jnp.where(first, cur_max,
                            max_val + avg_const * (cur_max - max_val))
        s, zp = _calc_qparams(new_min, new_max, quant_min, quant_max)
        return x, new_min, new_max, s.reshape(1), zp.reshape(1)

    if fakequant_on:
        s = scale[0]
        zpf = zero_point[0].astype(jnp.float32)
        y2d = pallas_fake_quantize(x2d, s, zpf, row_tile=block_rows,
                                   quant_min=quant_min, quant_max=quant_max)
        return _unflatten(y2d), min_val, max_val, scale, zero_point

    return x, min_val, max_val, scale, zero_point


# ---------------------------------------------------------------------------
# Module-equivalent wrapper (state = observer min/max, scale, zero_point)
# ---------------------------------------------------------------------------
class LptFakeQuantizeJax:
    """JAX/Pallas equivalent of LptFakeQuantize with the default
    MovingAverageMinMaxObserver (per-tensor affine). Forward pass only."""

    def __init__(self, quant_min=QUANT_MIN, quant_max=QUANT_MAX,
                 averaging_constant=AVERAGING_CONSTANT,
                 block_rows=_ROW_TILE, slab_rows_cap=None, vmem_limit=None):
        self.quant_min = quant_min
        self.quant_max = quant_max
        self.averaging_constant = float(averaging_constant)
        self.block_rows = int(block_rows)
        budget = _vmem_budget_bytes()
        self.vmem_limit = int(vmem_limit) if vmem_limit is not None else budget
        if slab_rows_cap is None:
            # leave headroom for the double-buffered in/out pipeline blocks
            slab_rows_cap = max((self.vmem_limit - 6 * 1024 * 1024) // (_LANE * 4),
                                self.block_rows)
        self.slab_rows_cap = int(slab_rows_cap)

        self.min_val = jnp.array(jnp.inf, jnp.float32)
        self.max_val = jnp.array(-jnp.inf, jnp.float32)
        self.scale = jnp.array([1.0], jnp.float32)
        self.zero_point = jnp.array([0], jnp.int32)
        self.fake_quant_enabled = True
        self.observer_enabled = True
        self.is_per_channel = False   # default observer is per-tensor
        # TODO(synk): per-channel qscheme variant not implemented.

    # --- LptBase-style toggles ---
    def enable_fake_quant(self, enabled=True):
        self.fake_quant_enabled = bool(enabled)

    def disable_fake_quant(self):
        self.enable_fake_quant(False)

    def enable_observer(self, enabled=True):
        self.observer_enabled = bool(enabled)

    def disable_observer(self):
        self.enable_observer(False)

    def calculate_qparams(self):
        return _calc_qparams(self.min_val, self.max_val,
                             self.quant_min, self.quant_max)

    def __call__(self, x):
        y, new_min, new_max, scale, zp = _lpt_forward(
            x, self.min_val, self.max_val, self.scale, self.zero_point,
            observer_on=bool(self.observer_enabled),
            fakequant_on=bool(self.fake_quant_enabled),
            quant_min=int(self.quant_min), quant_max=int(self.quant_max),
            avg_const=self.averaging_constant,
            block_rows=self.block_rows,
            slab_rows_cap=self.slab_rows_cap,
            vmem_limit=self.vmem_limit)
        if self.observer_enabled:
            self.min_val, self.max_val = new_min, new_max
            self.scale, self.zero_point = scale, zp
        return y


# ---------------------------------------------------------------------------
# Pure-JAX reference (stateful forward) for verification
# ---------------------------------------------------------------------------
def _reference_forward(x, min_val, max_val, c=AVERAGING_CONSTANT,
                       quant_min=QUANT_MIN, quant_max=QUANT_MAX):
    xf = x.astype(jnp.float32)
    cur_min = jnp.min(xf)
    cur_max = jnp.max(xf)
    first = jnp.logical_and(min_val == jnp.inf, max_val == -jnp.inf)
    new_min = jnp.where(first, cur_min, min_val + c * (cur_min - min_val))
    new_max = jnp.where(first, cur_max, max_val + c * (cur_max - max_val))
    min_neg = jnp.minimum(new_min, 0.0)
    max_pos = jnp.maximum(new_max, 0.0)
    scale = jnp.maximum((max_pos - min_neg) / float(quant_max - quant_min), EPS)
    zp = jnp.clip(quant_min - jnp.round(min_neg / scale), quant_min, quant_max)
    inv = 1.0 / scale
    xq = jnp.clip(jnp.round(xf * inv + zp), quant_min, quant_max)
    y = ((xq - zp) * scale).astype(x.dtype)
    return y, new_min, new_max, scale, zp


def _check_fq_close(y, y_ref, scale):
    # Outputs should be (nearly) bit-identical; allow rare one-level flips at
    # values sitting exactly on a rounding boundary (1-ulp divide differences).
    err = jnp.abs(y - y_ref)
    assert float(jnp.max(err)) <= float(scale) * 1.001 + 1e-6
    assert float(jnp.mean((err < 1e-5).astype(jnp.float32))) >= 0.999


if __name__ == "__main__":
    root = jax.random.PRNGKey(0)
    k1, k2, k3 = jax.random.split(root, 3)

    x1 = jax.random.normal(k1, (2, 4, 16, 16), jnp.float32) * 3.0
    x2 = jax.random.normal(k2, (2, 4, 16, 16), jnp.float32) * 1.5

    # ---- folded kernel, single block (slab-free residency), two calls ----
    fq = LptFakeQuantizeJax()
    y1 = fq(x1)
    jax.block_until_ready(y1)
    y1_ref, mn1, mx1, s1, _ = _reference_forward(
        x1, jnp.float32(jnp.inf), jnp.float32(-jnp.inf))
    assert y1.shape == x1.shape and y1.dtype == x1.dtype
    _check_fq_close(y1, y1_ref, s1)
    assert jnp.allclose(fq.min_val, mn1) and jnp.allclose(fq.max_val, mx1)

    y2 = fq(x2)
    jax.block_until_ready(y2)
    y2_ref, mn2, mx2, s2, zp2 = _reference_forward(x2, mn1, mx1)
    _check_fq_close(y2, y2_ref, s2)
    assert jnp.allclose(fq.min_val, mn2) and jnp.allclose(fq.max_val, mx2)
    assert jnp.allclose(fq.scale[0], s2, rtol=1e-6)
    assert int(fq.zero_point[0]) == int(zp2)

    # ---- folded kernel, multi-block with resident VMEM slab (2N HBM traffic) ----
    fq_s = LptFakeQuantizeJax(block_rows=8)       # 16 rows -> 2 blocks, slab path
    y1s = fq_s(x1)
    jax.block_until_ready(y1s)
    _check_fq_close(y1s, y1_ref, s1)
    assert jnp.allclose(fq_s.min_val, mn1) and jnp.allclose(fq_s.max_val, mx1)

    # ---- folded kernel, multi-block streaming (slab disabled) + ragged tail ----
    x3 = jax.random.normal(k3, (2, 4, 16, 12), jnp.float32) * 2.0   # 1536 elems = 12 rows
    fq2 = LptFakeQuantizeJax(block_rows=8, slab_rows_cap=0)
    y3 = fq2(x3)
    jax.block_until_ready(y3)
    y3_ref, mn3, mx3, s3, _ = _reference_forward(
        x3, jnp.float32(jnp.inf), jnp.float32(-jnp.inf))
    _check_fq_close(y3, y3_ref, s3)
    assert jnp.allclose(fq2.min_val, mn3) and jnp.allclose(fq2.max_val, mx3)

    # ---- fake-quant only (observer disabled): standalone parallel kernel ----
    fq.disable_observer()
    y4 = fq(x1)
    jax.block_until_ready(y4)
    s = fq.scale[0]
    zpf = fq.zero_point[0].astype(jnp.float32)
    y4_ref = (jnp.clip(jnp.round(x1 * (1.0 / s) + zpf), QUANT_MIN, QUANT_MAX) - zpf) * s
    _check_fq_close(y4, y4_ref, s)

    # ---- observer only (fake-quant disabled): partial min/max kernel ----
    fq3 = LptFakeQuantizeJax(block_rows=8)
    fq3.disable_fake_quant()
    y5 = fq3(x3)
    jax.block_until_ready(y5)
    assert jnp.array_equal(y5, x3)
    assert jnp.allclose(fq3.min_val, mn3) and jnp.allclose(fq3.max_val, mx3)

    print("KERNEL_OK")
</pallas_src>

<mosaic_0001>
module attributes {stable_mosaic.version = 11 : i64} {
  func.func @_obs_fq_kernel(%arg0: i32, %arg1: i32, %arg2: memref<3xf32, #tpu.memory_space<smem>>, %arg3: memref<16x128xf32, #tpu.memory_space<vmem>>, %arg4: memref<16x128xf32, #tpu.memory_space<vmem>>, %arg5: memref<5xf32, #tpu.memory_space<smem>>, %arg6: memref<8x128xf32, #tpu.memory_space<vmem>>, %arg7: memref<8x128xf32, #tpu.memory_space<vmem>>) attributes {dimension_semantics = [#tpu.dimension_semantics<arbitrary>, #tpu.dimension_semantics<arbitrary>], iteration_bounds = array<i64: 2, 1>, scalar_prefetch = 0 : i64, scratch_operands = 2 : i64, tpu.core_type = #tpu.core_type<tc>, window_params = [{transform_indices = @transform_0, window_bounds = array<i64: 3>}, {transform_indices = @transform_1, window_bounds = array<i64: 16, 128>}, {transform_indices = @transform_2, window_bounds = array<i64: 16, 128>}, {transform_indices = @transform_3, window_bounds = array<i64: 5>}]} {
    %c0_i32 = arith.constant 0 : i32
    %0 = arith.cmpi eq, %arg0, %c0_i32 : i32
    %1 = arith.extui %0 : i1 to i32
    %c0_i32_0 = arith.constant 0 : i32
    %2 = arith.cmpi ne, %1, %c0_i32_0 : i32
    scf.if %2 {
      %c0 = arith.constant 0 : index
      %c0_2 = arith.constant 0 : index
      %6 = vector.load %arg3[%c0, %c0_2] : memref<16x128xf32, #tpu.memory_space<vmem>>, vector<16x128xf32>
      %c0_i32_3 = arith.constant 0 : i32
      %7 = arith.cmpi eq, %arg1, %c0_i32_3 : i32
      %8 = arith.extui %7 : i1 to i32
      %c0_i32_4 = arith.constant 0 : i32
      %9 = arith.cmpi ne, %8, %c0_i32_4 : i32
      scf.if %9 {
        %cst_16 = arith.constant 0x7F800000 : f32
        %23 = vector.broadcast %cst_16 : f32 to vector<8x128xf32>
        %c0_17 = arith.constant 0 : index
        %c0_18 = arith.constant 0 : index
        %24 = vector.load %arg6[%c0_17, %c0_18] : memref<8x128xf32, #tpu.memory_space<vmem>>, vector<8x128xf32>
        tpu.vector_store %arg6[%c0_17, %c0_18], %23 {strides = array<i32>} : memref<8x128xf32, #tpu.memory_space<vmem>>, vector<8x128xf32>,
        %cst_19 = arith.constant 0xFF800000 : f32
        %25 = vector.broadcast %cst_19 : f32 to vector<8x128xf32>
        %c0_20 = arith.constant 0 : index
        %c0_21 = arith.constant 0 : index
        %26 = vector.load %arg7[%c0_20, %c0_21] : memref<8x128xf32, #tpu.memory_space<vmem>>, vector<8x128xf32>
        tpu.vector_store %arg7[%c0_20, %c0_21], %25 {strides = array<i32>} : memref<8x128xf32, #tpu.memory_space<vmem>>, vector<8x128xf32>,
      } else {
      }
      %c0_5 = arith.constant 0 : index
      %c0_6 = arith.constant 0 : index
      %10 = vector.load %arg6[%c0_5, %c0_6] : memref<8x128xf32, #tpu.memory_space<vmem>>, vector<8x128xf32>
      %11 = vector.shape_cast %6 : vector<16x128xf32> to vector<2x8x128xf32>
      %cst = arith.constant dense<0x7F800000> : vector<8x128xf32>
      %12 = vector.multi_reduction <minimumf>, %11, %cst [0] : vector<2x8x128xf32> to vector<8x128xf32>
      %13 = arith.minimumf %10, %12 : vector<8x128xf32>
      %c0_7 = arith.constant 0 : index
      %c0_8 = arith.constant 0 : index
      %14 = vector.load %arg6[%c0_7, %c0_8] : memref<8x128xf32, #tpu.memory_space<vmem>>, vector<8x128xf32>
      tpu.vector_store %arg6[%c0_7, %c0_8], %13 {strides = array<i32>} : memref<8x128xf32, #tpu.memory_space<vmem>>, vector<8x128xf32>,
      %c0_9 = arith.constant 0 : index
      %c0_10 = arith.constant 0 : index
      %15 = vector.load %arg7[%c0_9, %c0_10] : memref<8x128xf32, #tpu.memory_space<vmem>>, vector<8x128xf32>
      %16 = vector.shape_cast %6 : vector<16x128xf32> to vector<2x8x128xf32>
      %cst_11 = arith.constant dense<0xFF800000> : vector<8x128xf32>
      %17 = vector.multi_reduction <maximumf>, %16, %cst_11 [0] : vector<2x8x128xf32> to vector<8x128xf32>
      %18 = arith.maximumf %15, %17 : vector<8x128xf32>
      %c0_12 = arith.constant 0 : index
      %c0_13 = arith.constant 0 : index
      %19 = vector.load %arg7[%c0_12, %c0_13] : memref<8x128xf32, #tpu.memory_space<vmem>>, vector<8x128xf32>
      tpu.vector_store %arg7[%c0_12, %c0_13], %18 {strides = array<i32>} : memref<8x128xf32, #tpu.memory_space<vmem>>, vector<8x128xf32>,
      %c0_i32_14 = arith.constant 0 : i32
      %20 = arith.cmpi eq, %arg1, %c0_i32_14 : i32
      %21 = arith.extui %20 : i1 to i32
      %c0_i32_15 = arith.constant 0 : i32
      %22 = arith.cmpi ne, %21, %c0_i32_15 : i32
      scf.if %22 {
        %c0_16 = arith.constant 0 : index
        %c0_17 = arith.constant 0 : index
        %23 = vector.load %arg6[%c0_16, %c0_17] : memref<8x128xf32, #tpu.memory_space<vmem>>, vector<8x128xf32>
        %24 = vector.shape_cast %23 : vector<8x128xf32> to vector<1x8x128xf32>
        %cst_18 = arith.constant dense<0x7F800000> : vector<1xf32>
        %25 = vector.multi_reduction <minimumf>, %24, %cst_18 [1, 2] : vector<1x8x128xf32> to vector<1xf32>
        %26 = vector.shape_cast %25 : vector<1xf32> to vector<1x1x1xf32>
        %27 = vector.extract %26[0, 0, 0] : f32 from vector<1x1x1xf32>
        %c0_19 = arith.constant 0 : index
        %c0_20 = arith.constant 0 : index
        %28 = vector.load %arg7[%c0_19, %c0_20] : memref<8x128xf32, #tpu.memory_space<vmem>>, vector<8x128xf32>
        %29 = vector.shape_cast %28 : vector<8x128xf32> to vector<1x8x128xf32>
        %cst_21 = arith.constant dense<0xFF800000> : vector<1xf32>
        %30 = vector.multi_reduction <maximumf>, %29, %cst_21 [1, 2] : vector<1x8x128xf32> to vector<1xf32>
        %31 = vector.shape_cast %30 : vector<1xf32> to vector<1x1x1xf32>
        %32 = vector.extract %31[0, 0, 0] : f32 from vector<1x1x1xf32>
        %c0_22 = arith.constant 0 : index
        %33 = memref.load %arg2[%c0_22] : memref<3xf32, #tpu.memory_space<smem>>
        %c1 = arith.constant 1 : index
        %34 = memref.load %arg2[%c1] : memref<3xf32, #tpu.memory_space<smem>>
        %c2 = arith.constant 2 : index
        %35 = memref.load %arg2[%c2] : memref<3xf32, #tpu.memory_space<smem>>
        %36 = arith.subf %27, %33 : f32
        %37 = arith.mulf %35, %36 : f32
        %38 = arith.addf %33, %37 : f32
        %39 = arith.subf %32, %34 : f32
        %40 = arith.mulf %35, %39 : f32
        %41 = arith.addf %34, %40 : f32
        %c0_23 = arith.constant 0 : index
        %42 = memref.load %arg5[%c0_23] : memref<5xf32, #tpu.memory_space<smem>>
        memref.store %38, %arg5[%c0_23] : memref<5xf32, #tpu.memory_space<smem>>
        %c1_24 = arith.constant 1 : index
        %43 = memref.load %arg5[%c1_24] : memref<5xf32, #tpu.memory_space<smem>>
        memref.store %41, %arg5[%c1_24] : memref<5xf32, #tpu.memory_space<smem>>
        %cst_25 = arith.constant 0.000000e+00 : f32
        %44 = arith.minimumf %38, %cst_25 : f32
        %cst_26 = arith.constant 0.000000e+00 : f32
        %45 = arith.maximumf %41, %cst_26 : f32
        %cst_27 = arith.constant 1.000000e+00 : f32
        %46 = vector.broadcast %cst_27 : f32 to vector<1x128xf32>
        %47 = arith.subf %45, %44 : f32
        %48 = vector.broadcast %47 : f32 to vector<1x128xf32>
        %49 = arith.mulf %48, %46 : vector<1x128xf32>
        %cst_28 = arith.constant 2.550000e+02 : f32
        %50 = vector.broadcast %cst_28 : f32 to vector<1x128xf32>
        %51 = arith.divf %49, %50 : vector<1x128xf32>
        %cst_29 = arith.constant 1.1920929E-7 : f32
        %52 = vector.broadcast %cst_29 : f32 to vector<1x128xf32>
        %53 = arith.maximumf %51, %52 : vector<1x128xf32>
        %54 = vector.broadcast %44 : f32 to vector<1x128xf32>
        %55 = arith.divf %54, %53 : vector<1x128xf32>
        %56 = math.roundeven %55 : vector<1x128xf32>
        %cst_30 = arith.constant -1.280000e+02 : f32
        %57 = vector.broadcast %cst_30 : f32 to vector<1x128xf32>
        %58 = arith.subf %57, %56 : vector<1x128xf32>
        %cst_31 = arith.constant -1.280000e+02 : f32
        %cst_32 = arith.constant 1.270000e+02 : f32
        %59 = vector.broadcast %cst_31 : f32 to vector<1x128xf32>
        %60 = arith.maximumf %59, %58 : vector<1x128xf32>
        %61 = vector.broadcast %cst_32 : f32 to vector<1x128xf32>
        %62 = arith.minimumf %61, %60 : vector<1x128xf32>
        %63 = arith.divf %46, %53 : vector<1x128xf32>
        %64 = vector.shape_cast %53 : vector<1x128xf32> to vector<1x1x128xf32>
        %cst_33 = arith.constant dense<0x7F800000> : vector<1xf32>
        %65 = vector.multi_reduction <minimumf>, %64, %cst_33 [1, 2] : vector<1x1x128xf32> to vector<1xf32>
        %66 = vector.shape_cast %65 : vector<1xf32> to vector<1x1x1xf32>
        %67 = vector.extract %66[0, 0, 0] : f32 from vector<1x1x1xf32>
        %c2_34 = arith.constant 2 : index
        %68 = memref.load %arg5[%c2_34] : memref<5xf32, #tpu.memory_space<smem>>
        memref.store %67, %arg5[%c2_34] : memref<5xf32, #tpu.memory_space<smem>>
        %69 = vector.shape_cast %62 : vector<1x128xf32> to vector<1x1x128xf32>
        %cst_35 = arith.constant dense<0x7F800000> : vector<1xf32>
        %70 = vector.multi_reduction <minimumf>, %69, %cst_35 [1, 2] : vector<1x1x128xf32> to vector<1xf32>
        %71 = vector.shape_cast %70 : vector<1xf32> to vector<1x1x1xf32>
        %72 = vector.extract %71[0, 0, 0] : f32 from vector<1x1x1xf32>
        %c3 = arith.constant 3 : index
        %73 = memref.load %arg5[%c3] : memref<5xf32, #tpu.memory_space<smem>>
        memref.store %72, %arg5[%c3] : memref<5xf32, #tpu.memory_space<smem>>
        %74 = vector.shape_cast %63 : vector<1x128xf32> to vector<1x1x128xf32>
        %cst_36 = arith.constant dense<0x7F800000> : vector<1xf32>
        %75 = vector.multi_reduction <minimumf>, %74, %cst_36 [1, 2] : vector<1x1x128xf32> to vector<1xf32>
        %76 = vector.shape_cast %75 : vector<1xf32> to vector<1x1x1xf32>
        %77 = vector.extract %76[0, 0, 0] : f32 from vector<1x1x1xf32>
        %c4 = arith.constant 4 : index
        %78 = memref.load %arg5[%c4] : memref<5xf32, #tpu.memory_space<smem>>
        memref.store %77, %arg5[%c4] : memref<5xf32, #tpu.memory_space<smem>>
      } else {
      }
    } else {
    }
    %c1_i32 = arith.constant 1 : i32
    %3 = arith.cmpi eq, %arg0, %c1_i32 : i32
    %4 = arith.extui %3 : i1 to i32
    %c0_i32_1 = arith.constant 0 : i32
    %5 = arith.cmpi ne, %4, %c0_i32_1 : i32
    scf.if %5 {
      %c2 = arith.constant 2 : index
      %6 = memref.load %arg5[%c2] : memref<5xf32, #tpu.memory_space<smem>>
      %c3 = arith.constant 3 : index
      %7 = memref.load %arg5[%c3] : memref<5xf32, #tpu.memory_space<smem>>
      %c4 = arith.constant 4 : index
      %8 = memref.load %arg5[%c4] : memref<5xf32, #tpu.memory_space<smem>>
      %c0 = arith.constant 0 : index
      %c0_2 = arith.constant 0 : index
      %9 = vector.load %arg3[%c0, %c0_2] : memref<16x128xf32, #tpu.memory_space<vmem>>, vector<16x128xf32>
      %10 = vector.broadcast %8 : f32 to vector<16x128xf32>
      %11 = arith.mulf %9, %10 : vector<16x128xf32>
      %12 = vector.broadcast %7 : f32 to vector<16x128xf32>
      %13 = arith.addf %11, %12 : vector<16x128xf32>
      %14 = math.roundeven %13 : vector<16x128xf32>
      %cst = arith.constant -1.280000e+02 : f32
      %cst_3 = arith.constant 1.270000e+02 : f32
      %15 = vector.broadcast %cst : f32 to vector<16x128xf32>
      %16 = arith.maximumf %15, %14 : vector<16x128xf32>
      %17 = vector.broadcast %cst_3 : f32 to vector<16x128xf32>
      %18 = arith.minimumf %17, %16 : vector<16x128xf32>
      %19 = vector.broadcast %7 : f32 to vector<16x128xf32>
      %20 = arith.subf %18, %19 : vector<16x128xf32>
      %21 = vector.broadcast %6 : f32 to vector<16x128xf32>
      %22 = arith.mulf %20, %21 : vector<16x128xf32>
      %c0_4 = arith.constant 0 : index
      %c0_5 = arith.constant 0 : index
      %23 = vector.load %arg4[%c0_4, %c0_5] : memref<16x128xf32, #tpu.memory_space<vmem>>, vector<16x128xf32>
      tpu.vector_store %arg4[%c0_4, %c0_5], %22 {strides = array<i32>} : memref<16x128xf32, #tpu.memory_space<vmem>>, vector<16x128xf32>,
    } else {
    }
    return
  }
  func.func @transform_0(%arg0: i32, %arg1: i32) -> i32 {
    %c0_i32 = arith.constant 0 : i32
    %c0_i32_0 = arith.constant 0 : i32
    return %c0_i32 : i32
  }
  func.func @transform_1(%arg0: i32, %arg1: i32) -> (i32, i32) {
    %c0_i32 = arith.constant 0 : i32
    %c0_i32_0 = arith.constant 0 : i32
    return %arg1, %c0_i32 : i32, i32
  }
  func.func @transform_2(%arg0: i32, %arg1: i32) -> (i32, i32) {
    %0 = arith.muli %arg1, %arg0 : i32
    %c0_i32 = arith.constant 0 : i32
    %c0_i32_0 = arith.constant 0 : i32
    return %0, %c0_i32 : i32, i32
  }
  func.func @transform_3(%arg0: i32, %arg1: i32) -> i32 {
    %c0_i32 = arith.constant 0 : i32
    %c0_i32_0 = arith.constant 0 : i32
    return %c0_i32 : i32
  }
}

</mosaic_0001>

<llo_original>
// kernel: _lpt_forward.1
$region0: #{_lpt_forward.1}
  #allocation0 [shape = 'u32[]', space=smem, size = 0x4, offset = 0x4, fixed_abs, tag = 'smem constant byte address 0x4 - core index']
  #allocation1 [shape = 'u32[144,128]{1,0:T(1,128)}', space=vmem, size = 0x12000, scoped, tag = 'internal scratch']
  #allocation2 [shape = 'f32[8,128]{1,0:T(8,128)}', space=vmem, size = 0x1000, scoped, tag = 'scratch operand']
  #allocation3 [shape = 'f32[8,128]{1,0:T(8,128)}', space=vmem, size = 0x1000, scoped, tag = 'scratch operand']
  %s0 = inlined_call_operand.vmem [shape: f32[3], index: 0, kind: input, shape index: {}]
  %s1 = inlined_call_operand.vmem [shape: f32[16,128], index: 1, kind: input, shape index: {}]
  %s2 = inlined_call_operand.vmem [shape: f32[16,128], index: 2, kind: output, shape index: {0}]
  %s3 = inlined_call_operand.vmem [shape: f32[5], index: 3, kind: output, shape index: {1}]
  %4 = xla_tuple %s2, %s3
  %s5 = sld [smem:[#allocation0]]
  $region69: #{_lpt_forward.1} parent=0
    _
  %s7 = ssub.s32 1, %s5
  %s8 = scalar_select 0, %s7, %s5
  $region1: #{_lpt_forward.1} parent=0
    #allocation4 [shape = 'u8[512]{0}', space=smem, size = 0x200, scoped, tag = 'input window, operand 0, single buffered']
    #allocation5 [shape = 's32[2]{0}', space=sflag, size = 0x8, scoped, tag = 'scoped memory for _lpt_forward.1']
    #allocation6 [shape = 's32[2]{0}', space=sflag, size = 0x8, scoped, tag = 'scoped memory for _lpt_forward.1']
    #allocation7 [shape = 'u8[512]{0}', space=smem, size = 0x200, scoped, tag = 'output window, operand 1, single buffered']
    %9 = vsyncpa [#allocation5], 0
    %10 = vsyncpa [#allocation6], 0
    loop: start=0, step=1, limit=4
    $region2: #{_lpt_forward.1} parent=1 // loop_pre_header
      _
    $region3: #{_lpt_forward.1} parent=1 // loop_header
      %s12 = sphi 0, %s16
      %p13 = scmp.ge.s32.totalorder %s12, 4
      %s19 = sphi 0, %s31
      %s20 = sphi 0, %s27
      %s21 = sphi 0, %s19
      %s22 = sphi 0, %s20
      %s23 = sphi 0, %s21
      %s24 = sphi 0, %s22
      %s32 = sphi 0, %s32
      %s34 = sphi 0, %s32
      %s35 = sphi 0, %s34
      %s49 = sphi 0, %s35
      %s55 = sphi 0, %s57
      %s58 = sphi 0, %s55
      %s59 = sphi 0, %s58
      %s75 = sphi 0, %s59
      %s83 = sphi 0, %s85
      %s86 = sphi 0, %s83
      %s87 = sphi 0, %s86
      %s103 = sphi 0, %s87
      %s107 = sphi 0, %s107
      %s109 = sphi 0, %s107
      %s110 = sphi 0, %s109
      %s124 = sphi 0, %s110
    $region4: #{_lpt_forward.1} parent=1 // loop_header_branch
      %15 = sbr.rel (%p13) target = $region8
    $region5: #{_lpt_forward.1} parent=1 // loop_body
      %s17 = ssub.s32 %s12, 1
      %s18 = ssub.s32 %s12, 2
      %s25 = sadd.s32 1, %s20
      %p26 = scmp.ge.s32.totalorder %s25, 1
      %s27 = scalar_select %p26, 0, %s25
      %s28 = sadd.s32 1, %s19
      %s29 = scalar_select %p26, %s28, %s19
      %p30 = scmp.ge.s32.totalorder %s29, 2
      %s31 = scalar_select %p30, 0, %s29
      %s33 = sadd.s32 %s32, 1
      %p36 = scmp.eq.s32.totalorder %s12, 1
      %p37 = scmp.ne.s32.totalorder %s32, %s34
      %p38 = scmp.eq.s32.totalorder %s12, 0
      %p39 = por %p37, %p38
      %p40 = scmp.ne.s32.totalorder %s32, %s34
      %p41 = scmp.eq.s32.totalorder %s17, 1
      %p42 = por %p40, %p41
      %p43 = scmp.ne.s32.totalorder %s34, %s35
      %p44 = scmp.eq.s32.totalorder %s17, 0
      %p45 = por %p43, %p44
      %p46 = scmp.ne.s32.totalorder %s34, %s35
      %p47 = scmp.eq.s32.totalorder %s18, 1
      %p48 = por %p46, %p47
      %p50 = scmp.ne.s32.totalorder %s35, %s49
      %p51 = scmp.eq.s32.totalorder %s18, 0
      %p52 = por %p50, %p51
      %s53 = ssub.s32 %s20, %s27
      %p54 = scmp.eq.s32.totalorder %s53, 0
      %s56 = sadd.s32 %s55, 1
      %s57 = scalar_select %p54, %s55, %s56
      %p60 = pneg %p54
      %p61 = scmp.eq.s32.totalorder %s12, 1
      %p62 = por %p60, %p61
      %p63 = scmp.ne.s32.totalorder %s55, %s58
      %p64 = scmp.eq.s32.totalorder %s12, 0
      %p65 = por %p63, %p64
      %p66 = scmp.ne.s32.totalorder %s55, %s58
      %p67 = scmp.eq.s32.totalorder %s17, 1
      %p68 = por %p66, %p67
      %p69 = scmp.ne.s32.totalorder %s58, %s59
      %p70 = scmp.eq.s32.totalorder %s17, 0
      %p71 = por %p69, %p70
      %p72 = scmp.ne.s32.totalorder %s58, %s59
      %p73 = scmp.eq.s32.totalorder %s18, 1
      %p74 = por %p72, %p73
      %p76 = scmp.ne.s32.totalorder %s59, %s75
      %p77 = scmp.eq.s32.totalorder %s18, 0
      %p78 = por %p76, %p77
      %s79 = smul.u32 %s20, %s19
      %s80 = smul.u32 %s27, %s31
      %s81 = ssub.s32 %s79, %s80
      %p82 = scmp.eq.s32.totalorder %s81, 0
      %s84 = sadd.s32 %s83, 1
      %s85 = scalar_select %p82, %s83, %s84
      %p88 = pneg %p82
      %p89 = scmp.eq.s32.totalorder %s12, 1
      %p90 = por %p88, %p89
      %p91 = scmp.ne.s32.totalorder %s83, %s86
      %p92 = scmp.eq.s32.totalorder %s12, 0
      %p93 = por %p91, %p92
      %p94 = scmp.ne.s32.totalorder %s83, %s86
      %p95 = scmp.eq.s32.totalorder %s17, 1
      %p96 = por %p94, %p95
      %p97 = scmp.ne.s32.totalorder %s86, %s87
      %p98 = scmp.eq.s32.totalorder %s17, 0
      %p99 = por %p97, %p98
      %p100 = scmp.ne.s32.totalorder %s86, %s87
      %p101 = scmp.eq.s32.totalorder %s18, 1
      %p102 = por %p100, %p101
      %p104 = scmp.ne.s32.totalorder %s87, %s103
      %p105 = scmp.eq.s32.totalorder %s18, 0
      %p106 = por %p104, %p105
      %s108 = sadd.s32 %s107, 1
      %p111 = scmp.eq.s32.totalorder %s12, 1
      %p112 = scmp.ne.s32.totalorder %s107, %s109
      %p113 = scmp.eq.s32.totalorder %s12, 0
      %p114 = por %p112, %p113
      %p115 = scmp.ne.s32.totalorder %s107, %s109
      %p116 = scmp.eq.s32.totalorder %s17, 1
      %p117 = por %p115, %p116
      %p118 = scmp.ne.s32.totalorder %s109, %s110
      %p119 = scmp.eq.s32.totalorder %s17, 0
      %p120 = por %p118, %p119
      %p121 = scmp.ne.s32.totalorder %s109, %s110
      %p122 = scmp.eq.s32.totalorder %s18, 1
      %p123 = por %p121, %p122
      %p125 = scmp.ne.s32.totalorder %s110, %s124
      %p126 = scmp.eq.s32.totalorder %s18, 0
      %p127 = por %p125, %p126
      %p128 = scmp.le.s32.totalorder 1, %s12
      %p129 = scmp.lt.s32.totalorder %s12, 3
      %p130 = pnand %p128, %p129
      %p131 = pneg %p130
      // Predicated region
      $region9: #{_lpt_forward.1} parent=5 // pred_check
        _
      $region10: #{_lpt_forward.1} parent=5 // pred_check_branch
        %133 = sbr.rel (%p130) target = $region12
      $region11: #{_lpt_forward.1} parent=5 // pred_region
        %s134 = ssub.s32 %s12, 1
        // Predicated region
        $region13: #{_lpt_forward.1} parent=11 // pred_check
          %p135 = pneg %p45
        $region14: #{_lpt_forward.1} parent=11 // pred_check_branch
          %137 = sbr.rel (%p135) target = $region16
        $region15: #{_lpt_forward.1} parent=11 // pred_region
          %s139 = ssub.s32 16, 16
          %140 = vsyncadd [#allocation5], %s139
          %s142 = sshll.u32 %s0, 4
          %s143 = int_to_ptr.vmem [resolvable:$true] %s142
          %145 = dma.vmem_to_smem %s143, 16, [#allocation4], [#allocation5]
        $region16: #{_lpt_forward.1} parent=11 // pred_fallthru
          _
        // Predicated region
        $region17: #{_lpt_forward.1} parent=11 // pred_check
          %p146 = pneg %p71
        $region18: #{_lpt_forward.1} parent=11 // pred_check_branch
          %148 = sbr.rel (%p146) target = $region20
        $region19: #{_lpt_forward.1} parent=11 // pred_region
          %s149 = smul.u32 2, %s22
          %p150 = scmp.lt.s32.totalorder %s149, 1
          %s151 = scalar_select %p150, %s149, 1
          %s152 = smul.addr %s151, 8
          %s153 = scalar_lea.vmem %s1, %s152
          %s154 = smul.u32 2, %s22
        $region20: #{_lpt_forward.1} parent=11 // pred_fallthru
          _
      $region12: #{_lpt_forward.1} parent=5 // pred_fallthru
        _
      %p155 = scmp.lt.s32.totalorder %s12, 2
      // Predicated region
      $region21: #{_lpt_forward.1} parent=5 // pred_check
        %p156 = pneg %p155
      $region22: #{_lpt_forward.1} parent=5 // pred_check_branch
        %158 = sbr.rel (%p156) target = $region24
      $region23: #{_lpt_forward.1} parent=5 // pred_region
        _
      $region24: #{_lpt_forward.1} parent=5 // pred_fallthru
        _
      %p159 = scmp.le.s32.totalorder 1, %s12
      %p160 = scmp.lt.s32.totalorder %s12, 3
      %p161 = pnand %p159, %p160
      %p162 = pneg %p161
      // Predicated region
      $region25: #{_lpt_forward.1} parent=5 // pred_check
        _
      $region26: #{_lpt_forward.1} parent=5 // pred_check_branch
        %164 = sbr.rel (%p161) target = $region28
      $region27: #{_lpt_forward.1} parent=5 // pred_region
        %s165 = ssub.s32 %s12, 1
        // Predicated region
        $region29: #{_lpt_forward.1} parent=27 // pred_check
          %p166 = pneg %p45
        $region30: #{_lpt_forward.1} parent=27 // pred_check_branch
          %168 = sbr.rel (%p166) target = $region32
        $region31: #{_lpt_forward.1} parent=27 // pred_region
          %169 = dma.done [#allocation5], 16
        $region32: #{_lpt_forward.1} parent=27 // pred_fallthru
          _
        %170 = sfence
        %p171 = pneg %p45
        %p172 = pneg %p42
        %s173 = smul.u32 2, %s22
        %p174 = scmp.lt.s32.totalorder %s173, 1
        %s175 = scalar_select %p174, %s173, 1
        %s176 = smul.addr %s175, 8
        %s177 = scalar_lea.vmem %s1, %s176
        %p178 = pneg %p71
        %p179 = pneg %p68
        %p180 = pneg %p99
        %p181 = pneg %p96
        %s182 = smul.u32 %s22, %s21
        %s183 = smul.u32 2, %s182
        %p184 = scmp.lt.s32.totalorder %s183, 1
        %s185 = scalar_select %p184, %s183, 1
        %s186 = smul.addr %s185, 8
        %s187 = scalar_lea.vmem %s2, %s186
        %p188 = pneg %p120
        %p189 = pneg %p117
        %s190 = smul.u32 2, %s22
        %p191 = scmp.lt.s32.totalorder %s190, 1
        %s192 = scalar_select %p191, %s190, 1
        %s193 = smul.addr %s192, 8
        %s194 = scalar_lea.vmem %s1, %s193
        %s195 = smul.u32 2, %s22
        %s196 = smul.u32 %s22, %s21
        %s197 = smul.u32 2, %s196
        %p198 = scmp.lt.s32.totalorder %s197, 1
        %s199 = scalar_select %p198, %s197, 1
        %s200 = smul.addr %s199, 8
        %s201 = scalar_lea.vmem %s2, %s200
        %s202 = smul.u32 %s22, %s21
        %s203 = smul.u32 2, %s202
        %p204 = scmp.eq.s32.totalorder %s21, 0
        // Predicated region
        $region33: #{_lpt_forward.1} parent=27 // pred_check
          %p205 = pneg %p204
        $region34: #{_lpt_forward.1} parent=27 // pred_check_branch
          %207 = sbr.rel (%p205) target = $region36
        $region35: #{_lpt_forward.1} parent=27 // pred_region
          %v208 = vld [vmem:[%s194] sm:$0xff]
          %v209 = vld [vmem:[%s194 + $0x8] sm:$0xff]
          %p210 = scmp.eq.s32.totalorder %s22, 0
          // Predicated region
          $region37: #{_lpt_forward.1} parent=35 // pred_check
            %p211 = pneg %p210
          $region38: #{_lpt_forward.1} parent=35 // pred_check_branch
            %213 = sbr.rel (%p211) target = $region40
          $region39: #{_lpt_forward.1} parent=35 // pred_region
            %214 = vst [vmem:[#allocation2] sm:$0xff] inf
            %215 = vst [vmem:[#allocation3] sm:$0xff] -inf
          $region40: #{_lpt_forward.1} parent=35 // pred_fallthru
            _
          %v216 = vld [vmem:[#allocation2] sm:$0xff]
          %v217 = vmin.f32 %v208, %v209
          %v218 = vmin.f32 %v216, %v217
          %219 = vst [vmem:[#allocation2] sm:$0xff] %v218
          %v220 = vld [vmem:[#allocation3] sm:$0xff]
          %v221 = vmax.f32 %v208, %v209
          %v222 = vmax.f32 %v220, %v221
          %223 = vst [vmem:[#allocation3] sm:$0xff] %v222
          // Predicated region
          $region41: #{_lpt_forward.1} parent=35 // pred_check
            %p224 = pneg %p210
          $region42: #{_lpt_forward.1} parent=35 // pred_check_branch
            %226 = sbr.rel (%p224) target = $region44
          $region43: #{_lpt_forward.1} parent=35 // pred_region
            %v227 = vld [vmem:[#allocation2] sm:$0xff]
            %228 = vmin.xlane.f32.xlu0 %v227
            %v229 = vpop.xlane.xlu0 %228
            %v230 = vrot.slane %v229, 4
            %v231 = vmin.f32 %v229, %v230
            %v232 = vrot.slane %v231, 2
            %v233 = vmin.f32 %v231, %v232
            %v234 = vrot.slane %v233, 1
            %v235 = vmin.f32 %v233, %v234
            %s236 = vtos %v235
            %v237 = vld [vmem:[#allocation3] sm:$0xff]
            %238 = vmax.xlane.f32.xlu0 %v237
            %v239 = vpop.xlane.xlu0 %238
            %v240 = vrot.slane %v239, 4
            %v241 = vmax.f32 %v239, %v240
            %v242 = vrot.slane %v241, 2
            %v243 = vmax.f32 %v241, %v242
            %v244 = vrot.slane %v243, 1
            %v245 = vmax.f32 %v243, %v244
            %s246 = vtos %v245
            %s247 = sld [smem:[#allocation4]]
            %s248 = sld [smem:[#allocation4 + $0x1]]
            %s249 = sld [smem:[#allocation4 + $0x2]]
            %s250 = ssub.f32 %s236, %s247
            %s251 = smul.f32 %s249, %s250
            %s252 = sadd.f32 %s247, %s251
            %s253 = ssub.f32 %s246, %s248
            %s254 = smul.f32 %s249, %s253
            %s255 = sadd.f32 %s248, %s254
            %s256 = scalar_lea.smem [#allocation7], 0
            %257 = sst [smem:[%s256]] %s252
            %s258 = scalar_lea.smem [#allocation7], 1
            %259 = sst [smem:[%s258]] %s255
            %s260 = smin.f32 %s252, 0.0
            %s261 = smax.f32 %s255, 0.0
            %s262 = ssub.f32 %s261, %s260
            %v263 = vstv %s262
            %v264 = vrcp.pop 255.0
            %v265 = vmul.f32 %v263, %v264
            %v266 = vmax.f32 %v265, 1.1920929e-07
            %v267 = vstv %s260
            %v268 = vrcp.pop %v266
            %v269 = vmul.f32 %v267, %v268
            %v270 = vround.ne.pseudo %v269
            %v271 = vsub.f32 -128.0, %v270
            %v272 = vmax.f32 %v271, -128.0
            %v273 = vmin.f32 %v272, 127.0
            %v274 = vmul.f32 1.0, %v268
            %s275 = vtos %v266
            %s276 = scalar_lea.smem [#allocation7], 2
            %277 = sst [smem:[%s276]] %s275
            %s278 = vtos %v273
            %s279 = scalar_lea.smem [#allocation7], 3
            %280 = sst [smem:[%s279]] %s278
            %s281 = vtos %v274
            %s282 = scalar_lea.smem [#allocation7], 4
            %283 = sst [smem:[%s282]] %s281
          $region44: #{_lpt_forward.1} parent=35 // pred_fallthru
            _
        $region36: #{_lpt_forward.1} parent=27 // pred_fallthru
          _
        %p284 = scmp.eq.s32.totalorder %s21, 1
        // Predicated region
        $region45: #{_lpt_forward.1} parent=27 // pred_check
          %p285 = pneg %p284
        $region46: #{_lpt_forward.1} parent=27 // pred_check_branch
          %287 = sbr.rel (%p285) target = $region48
        $region47: #{_lpt_forward.1} parent=27 // pred_region
          %s288 = sld [smem:[#allocation7 + $0x2]]
          %s289 = sld [smem:[#allocation7 + $0x3]]
          %s290 = sld [smem:[#allocation7 + $0x4]]
          %v291 = vld [vmem:[%s194] sm:$0xff]
          %v292 = vld [vmem:[%s194 + $0x8] sm:$0xff]
          %v293 = vstv %s290
          %v294 = vmul.f32 %v291, %v293
          %v295 = vmul.f32 %v292, %v293
          %v296 = vstv %s289
          %v297 = vadd.f32 %v294, %v296
          %v298 = vadd.f32 %v295, %v296
          %v299 = vround.ne.pseudo %v297
          %v300 = vround.ne.pseudo %v298
          %v301 = vmax.f32 %v299, -128.0
          %v302 = vmax.f32 %v300, -128.0
          %v303 = vmin.f32 %v301, 127.0
          %v304 = vmin.f32 %v302, 127.0
          %v305 = vsub.f32 %v303, %v296
          %v306 = vsub.f32 %v304, %v296
          %v307 = vstv %s288
          %v308 = vmul.f32 %v305, %v307
          %v309 = vmul.f32 %v306, %v307
          %310 = vst [vmem:[%s201] sm:$0xff] %v308
          %311 = vst [vmem:[%s201 + $0x8] sm:$0xff] %v309
        $region48: #{_lpt_forward.1} parent=27 // pred_fallthru
          _
        %s312 = smul.u32 %s22, %s21
        %s313 = smul.u32 2, %s312
        %p314 = scmp.lt.s32.totalorder %s313, 1
        %s315 = scalar_select %p314, %s313, 1
        %s316 = smul.addr %s315, 8
        %s317 = scalar_lea.vmem %s2, %s316
        // Predicated region
        $region49: #{_lpt_forward.1} parent=27 // pred_check
          %p318 = pneg %p96
        $region50: #{_lpt_forward.1} parent=27 // pred_check_branch
          %320 = sbr.rel (%p318) target = $region52
        $region51: #{_lpt_forward.1} parent=27 // pred_region
          %s321 = smul.u32 %s22, %s21
          %s322 = smul.u32 2, %s321
        $region52: #{_lpt_forward.1} parent=27 // pred_fallthru
          _
        // Predicated region
        $region53: #{_lpt_forward.1} parent=27 // pred_check
          %p323 = pneg %p117
        $region54: #{_lpt_forward.1} parent=27 // pred_check_branch
          %325 = sbr.rel (%p323) target = $region56
        $region55: #{_lpt_forward.1} parent=27 // pred_region
          %s327 = ssub.s32 16, 16
          %328 = vsyncadd [#allocation6], %s327
          %s330 = sshll.u32 %s3, 4
          %s331 = int_to_ptr.vmem [resolvable:$true] %s330
          %333 = dma.smem_to_vmem [#allocation7], 16, %s331, [#allocation6]
        $region56: #{_lpt_forward.1} parent=27 // pred_fallthru
          _
        // Predicated region
        $region57: #{_lpt_forward.1} parent=27 // pred_check
          %p334 = pneg %p117
        $region58: #{_lpt_forward.1} parent=27 // pred_check_branch
          %336 = sbr.rel (%p334) target = $region60
        $region59: #{_lpt_forward.1} parent=27 // pred_region
          %337 = dma.done [#allocation6], 16
        $region60: #{_lpt_forward.1} parent=27 // pred_fallthru
          _
        %338 = sfence
      $region28: #{_lpt_forward.1} parent=5 // pred_fallthru
        _
      %p339 = scmp.le.s32.totalorder 2, %s12
      // Predicated region
      $region61: #{_lpt_forward.1} parent=5 // pred_check
        %p340 = pneg %p339
      $region62: #{_lpt_forward.1} parent=5 // pred_check_branch
        %342 = sbr.rel (%p340) target = $region64
      $region63: #{_lpt_forward.1} parent=5 // pred_region
        %s343 = ssub.s32 %s12, 2
        // Predicated region
        $region65: #{_lpt_forward.1} parent=63 // pred_check
          %p344 = pneg %p102
        $region66: #{_lpt_forward.1} parent=63 // pred_check_branch
          %346 = sbr.rel (%p344) target = $region68
        $region67: #{_lpt_forward.1} parent=63 // pred_region
          %s347 = smul.u32 %s24, %s23
          %s348 = smul.u32 2, %s347
          %p349 = scmp.lt.s32.totalorder %s348, 1
          %s350 = scalar_select %p349, %s348, 1
          %s351 = smul.addr %s350, 8
          %s352 = scalar_lea.vmem %s2, %s351
        $region68: #{_lpt_forward.1} parent=63 // pred_fallthru
          _
      $region64: #{_lpt_forward.1} parent=5 // pred_fallthru
        _
    $region6: #{_lpt_forward.1} parent=1 // loop_footer
      %s16 = sadd.s32 1, %s12
    $region7: #{_lpt_forward.1} parent=1 // loop_footer_branch
      %11 = sbr.rel target = $region3
    $region8: #{_lpt_forward.1} parent=1 // loop_exit
      _
    %353 = vsyncpa [#allocation5], 1
    %s354 = scalar_lea.sflag [#allocation5], 1
    %355 = vsyncpa %s354, 1
    %356 = vsyncpa [#allocation6], 1
    %s357 = scalar_lea.sflag [#allocation6], 1
    %358 = vsyncpa %s357, 1

</llo_original>
